<compile_context>
chip_gen: v7x
topology: tpu7x:2x2x1
jax: 0.10.0
libtpu: 0.0.40
codegen_flags: <defaults>
</compile_context>

<pallas_src>
import functools

import jax
import jax.numpy as jnp
from jax.experimental import pallas as pl
from jax.experimental.pallas import tpu as pltpu

LANES = 128
MAX_TILE_ROWS = 4096  # (4096, 128) f32 = 2 MiB / input / buffer


def _hinge_partial_kernel(
    q_ref, t_ref, out_ref, *, tile_rows, fold_sublanes, valid_rows, needs_mask
):
    """Accumulates per-lane partial hinge sums into a resident (fold, 128) block."""
    i = pl.program_id(0)

    @pl.when(i == 0)
    def _():
        out_ref[...] = jnp.zeros_like(out_ref)

    q = q_ref[...].astype(jnp.float32)
    t = t_ref[...].astype(jnp.float32)
    hinge = jnp.maximum(0.0, 1.0 - q * t)

    def fold(x):
        # (tile_rows, 128) -> (fold_sublanes, 128): pure vreg-vreg VPU adds when
        # fold_sublanes == 8 (no cross-sublane reduce inside the hot loop).
        return x.reshape(tile_rows // fold_sublanes, fold_sublanes, LANES).sum(axis=0)

    if needs_mask:
        last = pl.num_programs(0) - 1

        @pl.when(i != last)
        def _():
            out_ref[...] += fold(hinge)

        @pl.when(i == last)
        def _():
            # Only the last block can contain rows past the true row count.
            # Mask on the (small) global row index: no int32-overflow hazard.
            row_ids = jax.lax.broadcasted_iota(jnp.int32, hinge.shape, 0)
            global_row = i * tile_rows + row_ids
            masked = jnp.where(global_row < valid_rows, hinge, 0.0)
            out_ref[...] += fold(masked)

    else:
        out_ref[...] += fold(hinge)


def quantum_hinge_loss(quantum_output, target_output, *, max_tile_rows=MAX_TILE_ROWS):
    """mean(max(0, 1 - quantum_output * target_output)) via a Pallas kernel."""
    assert quantum_output.shape == target_output.shape
    n = quantum_output.size

    q = quantum_output.reshape(-1)
    t = target_output.reshape(-1)

    n_tail = n % LANES
    n_aligned = n - n_tail

    total = jnp.float32(0.0)

    if n_tail:
        # <128-element ragged tail: tiny jnp expression, no whole-array pad/copy.
        q_tail = q[n_aligned:].astype(jnp.float32)
        t_tail = t[n_aligned:].astype(jnp.float32)
        total = total + jnp.sum(jnp.maximum(0.0, 1.0 - q_tail * t_tail))

    if n_aligned:
        rows = n_aligned // LANES
        tile_rows = rows if rows <= max_tile_rows else max_tile_rows
        # (8,128)-aligned fold when possible; tiny single-block inputs with
        # rows % 8 != 0 fall back to a (1,128) accumulator.
        fold_sublanes = 8 if tile_rows % 8 == 0 else 1
        num_blocks = pl.cdiv(rows, tile_rows)
        needs_mask = (rows % tile_rows) != 0

        q_main = q if n_tail == 0 else q[:n_aligned]
        t_main = t if n_tail == 0 else t[:n_aligned]
        q2d = q_main.reshape(rows, LANES)
        t2d = t_main.reshape(rows, LANES)

        kernel = functools.partial(
            _hinge_partial_kernel,
            tile_rows=tile_rows,
            fold_sublanes=fold_sublanes,
            valid_rows=rows,
            needs_mask=needs_mask,
        )

        lane_partials = pl.pallas_call(
            kernel,
            out_shape=jax.ShapeDtypeStruct((fold_sublanes, LANES), jnp.float32),
            grid_spec=pltpu.PrefetchScalarGridSpec(
                num_scalar_prefetch=0,
                grid=(num_blocks,),
                in_specs=[
                    pl.BlockSpec((tile_rows, LANES), lambda i: (i, 0)),
                    pl.BlockSpec((tile_rows, LANES), lambda i: (i, 0)),
                ],
                # Constant block index -> output stays resident in VMEM as the
                # accumulator across the sequential grid axis.
                out_specs=pl.BlockSpec((fold_sublanes, LANES), lambda i: (0, 0)),
            ),
            compiler_params=pltpu.CompilerParams(
                dimension_semantics=("arbitrary",),
            ),
        )(q2d, t2d)

        total = total + jnp.sum(lane_partials)

    return total / jnp.float32(n)


def _reference(quantum_output, target_output):
    loss = jnp.maximum(
        jnp.zeros_like(quantum_output), 1.0 - quantum_output * target_output
    )
    return jnp.mean(loss)


if __name__ == "__main__":
    key = jax.random.PRNGKey(0)

    # Main check: small NCHW-style tensor (aligned, single block, no mask).
    k1, k2 = jax.random.split(key)
    shape = (2, 4, 16, 16)
    quantum_output = jax.random.normal(k1, shape, dtype=jnp.float32)
    target_output = jnp.where(
        jax.random.bernoulli(k2, 0.5, shape), 1.0, -1.0
    ).astype(jnp.float32)

    out = quantum_hinge_loss(quantum_output, target_output)
    jax.block_until_ready(out)
    ref = _reference(quantum_output, target_output)
    assert jnp.allclose(out, ref, rtol=1e-4, atol=1e-6), (out, ref)

    # Extra checks:
    #   (7, 256, 128)   : 128-aligned, single block.
    #   (5, 7, 9, 13)   : non-128-divisible -> aligned-prefix kernel + jnp tail,
    #                     rows % 8 != 0 -> (1,128) accumulator fallback.
    #   (3, 5)          : < 128 elements -> pure jnp tail path.
    for idx, extra_shape in enumerate([(7, 256, 128), (5, 7, 9, 13), (3, 5)]):
        ka, kb = jax.random.split(jax.random.fold_in(key, idx + 1))
        q_x = jax.random.normal(ka, extra_shape, dtype=jnp.float32)
        t_x = jnp.where(
            jax.random.bernoulli(kb, 0.5, extra_shape), 1.0, -1.0
        ).astype(jnp.float32)
        o = quantum_hinge_loss(q_x, t_x)
        jax.block_until_ready(o)
        r = _reference(q_x, t_x)
        assert jnp.allclose(o, r, rtol=1e-4, atol=1e-6), (extra_shape, o, r)

    # Multi-block grid with a partial (masked) last block, exercised at small
    # scale by shrinking max_tile_rows: rows=3000, tile=256 -> 12 blocks, ragged.
    kc, kd = jax.random.split(jax.random.fold_in(key, 99))
    big_shape = (5, 600, 128)
    q_b = jax.random.normal(kc, big_shape, dtype=jnp.float32)
    t_b = jnp.where(jax.random.bernoulli(kd, 0.5, big_shape), 1.0, -1.0).astype(
        jnp.float32
    )
    o_b = quantum_hinge_loss(q_b, t_b, max_tile_rows=256)
    jax.block_until_ready(o_b)
    r_b = _reference(q_b, t_b)
    assert jnp.allclose(o_b, r_b, rtol=1e-4, atol=1e-6), (o_b, r_b)

    print("KERNEL_OK")
</pallas_src>

<mosaic_0001>
module attributes {stable_mosaic.version = 11 : i64} {
  func.func @_hinge_partial_kernel(%arg0: i32, %arg1: memref<16x128xf32, #tpu.memory_space<vmem>>, %arg2: memref<16x128xf32, #tpu.memory_space<vmem>>, %arg3: memref<8x128xf32, #tpu.memory_space<vmem>>) attributes {dimension_semantics = [#tpu.dimension_semantics<arbitrary>], iteration_bounds = array<i64: 1>, scalar_prefetch = 0 : i64, scratch_operands = 0 : i64, tpu.core_type = #tpu.core_type<tc>, window_params = [{transform_indices = @transform_0, window_bounds = array<i64: 16, 128>}, {transform_indices = @transform_1, window_bounds = array<i64: 16, 128>}, {pipeline_mode = #tpu.pipeline_mode<synchronous>, transform_indices = @transform_2, window_bounds = array<i64: 8, 128>}]} {
    %c0_i32 = arith.constant 0 : i32
    %0 = arith.cmpi eq, %arg0, %c0_i32 : i32
    %1 = arith.extui %0 : i1 to i32
    %c0_i32_0 = arith.constant 0 : i32
    %2 = arith.cmpi ne, %1, %c0_i32_0 : i32
    scf.if %2 {
      %cst_10 = arith.constant 0.000000e+00 : f32
      %15 = vector.broadcast %cst_10 : f32 to vector<8x128xf32>
      %c0_11 = arith.constant 0 : index
      %c0_12 = arith.constant 0 : index
      %16 = vector.load %arg3[%c0_11, %c0_12] : memref<8x128xf32, #tpu.memory_space<vmem>>, vector<8x128xf32>
      tpu.vector_store %arg3[%c0_11, %c0_12], %15 {strides = array<i32>} : memref<8x128xf32, #tpu.memory_space<vmem>>, vector<8x128xf32>,
    } else {
    }
    %c0 = arith.constant 0 : index
    %c0_1 = arith.constant 0 : index
    %3 = vector.load %arg1[%c0, %c0_1] : memref<16x128xf32, #tpu.memory_space<vmem>>, vector<16x128xf32>
    %c0_2 = arith.constant 0 : index
    %c0_3 = arith.constant 0 : index
    %4 = vector.load %arg2[%c0_2, %c0_3] : memref<16x128xf32, #tpu.memory_space<vmem>>, vector<16x128xf32>
    %5 = arith.mulf %3, %4 : vector<16x128xf32>
    %cst = arith.constant 1.000000e+00 : f32
    %6 = vector.broadcast %cst : f32 to vector<16x128xf32>
    %7 = arith.subf %6, %5 : vector<16x128xf32>
    %cst_4 = arith.constant 0.000000e+00 : f32
    %8 = vector.broadcast %cst_4 : f32 to vector<16x128xf32>
    %9 = arith.maximumf %8, %7 : vector<16x128xf32>
    %c0_5 = arith.constant 0 : index
    %c0_6 = arith.constant 0 : index
    %10 = vector.load %arg3[%c0_5, %c0_6] : memref<8x128xf32, #tpu.memory_space<vmem>>, vector<8x128xf32>
    %11 = vector.shape_cast %9 : vector<16x128xf32> to vector<2x8x128xf32>
    %cst_7 = arith.constant dense<0.000000e+00> : vector<8x128xf32>
    %12 = vector.multi_reduction <add>, %11, %cst_7 [0] : vector<2x8x128xf32> to vector<8x128xf32>
    %13 = arith.addf %10, %12 : vector<8x128xf32>
    %c0_8 = arith.constant 0 : index
    %c0_9 = arith.constant 0 : index
    %14 = vector.load %arg3[%c0_8, %c0_9] : memref<8x128xf32, #tpu.memory_space<vmem>>, vector<8x128xf32>
    tpu.vector_store %arg3[%c0_8, %c0_9], %13 {strides = array<i32>} : memref<8x128xf32, #tpu.memory_space<vmem>>, vector<8x128xf32>,
    return
  }
  func.func @transform_0(%arg0: i32) -> (i32, i32) {
    %c0_i32 = arith.constant 0 : i32
    %c0_i32_0 = arith.constant 0 : i32
    return %arg0, %c0_i32 : i32, i32
  }
  func.func @transform_1(%arg0: i32) -> (i32, i32) {
    %c0_i32 = arith.constant 0 : i32
    %c0_i32_0 = arith.constant 0 : i32
    return %arg0, %c0_i32 : i32, i32
  }
  func.func @transform_2(%arg0: i32) -> (i32, i32) {
    %c0_i32 = arith.constant 0 : i32
    %c0_i32_0 = arith.constant 0 : i32
    %c0_i32_1 = arith.constant 0 : i32
    return %c0_i32, %c0_i32_0 : i32, i32
  }
}

</mosaic_0001>

<llo_original>
// kernel: tpu_custom_call.1
$region0: #{tpu_custom_call.1}
  #allocation0 [shape = 'u32[]', space=smem, size = 0x4, offset = 0x4, fixed_abs, tag = 'smem constant byte address 0x4 - core index']
  #allocation1 [shape = 'u32[144,128]{1,0:T(1,128)}', space=vmem, size = 0x12000, scoped, tag = 'internal scratch']
  %s0 = inlined_call_operand.hbm [shape: f32[16,128], index: 0, kind: input, shape index: {}]
  %s1 = inlined_call_operand.hbm [shape: f32[16,128], index: 1, kind: input, shape index: {}]
  %s2 = inlined_call_operand.hbm [shape: f32[8,128], index: 2, kind: output, shape index: {}]
  %s3 = sld [smem:[#allocation0]]
  $region30: #{tpu_custom_call.1} parent=0
    _
  %s5 = ssub.s32 1, %s3
  %s6 = scalar_select 0, %s5, %s3
  $region1: #{tpu_custom_call.1} parent=0
    #allocation2 [shape = 'u8[8192]{0}', space=vmem, size = 0x2000, scoped, tag = 'input window, operand 0, single buffered']
    #allocation3 [shape = 's32[1]{0}', space=sflag, size = 0x4, scoped, tag = 'scoped memory for tpu_custom_call.1']
    #allocation4 [shape = 's32[1]{0}', space=sflag, size = 0x4, scoped, tag = 'scoped memory for tpu_custom_call.1']
    #allocation5 [shape = 'u8[8192]{0}', space=vmem, size = 0x2000, scoped, tag = 'input window, operand 1, single buffered']
    #allocation6 [shape = 's32[1]{0}', space=sflag, size = 0x4, scoped, tag = 'scoped memory for tpu_custom_call.1']
    #allocation7 [shape = 'u8[4096]{0}', space=vmem, size = 0x1000, scoped, tag = 'output window, operand 0, single buffered']
    %7 = vsyncpa [#allocation3], 0
    %8 = vsyncpa [#allocation6], 0
    %9 = vsyncpa [#allocation4], 0
    // Predicated region
    $region2: #{tpu_custom_call.1} parent=1 // pred_check
      _
    $region3: #{tpu_custom_call.1} parent=1 // pred_check_branch
      %11 = sbr.rel (0) target = $region5
    $region4: #{tpu_custom_call.1} parent=1 // pred_region
      %s13 = ssub.s32 256, 256
      %14 = vsyncadd [#allocation3], %s13
      %s15 = sshll.u32 [#allocation2], 4
      %s16 = int_to_ptr.vmem [resolvable:$true] %s15
      %21 = dma.hbm_to_vmem [thread:$0]  %s0, 256, %s16, [#allocation3], 128, 128, 8
    $region5: #{tpu_custom_call.1} parent=1 // pred_fallthru
      _
    // Predicated region
    $region6: #{tpu_custom_call.1} parent=1 // pred_check
      _
    $region7: #{tpu_custom_call.1} parent=1 // pred_check_branch
      %23 = sbr.rel (0) target = $region9
    $region8: #{tpu_custom_call.1} parent=1 // pred_region
      %s25 = ssub.s32 256, 256
      %26 = vsyncadd [#allocation6], %s25
      %s27 = sshll.u32 [#allocation5], 4
      %s28 = int_to_ptr.vmem [resolvable:$true] %s27
      %33 = dma.hbm_to_vmem [thread:$0]  %s1, 256, %s28, [#allocation6], 128, 128, 8
    $region9: #{tpu_custom_call.1} parent=1 // pred_fallthru
      _
    // Predicated region
    $region10: #{tpu_custom_call.1} parent=1 // pred_check
      _
    $region11: #{tpu_custom_call.1} parent=1 // pred_check_branch
      %35 = sbr.rel (0) target = $region13
    $region12: #{tpu_custom_call.1} parent=1 // pred_region
      %36 = dma.done [#allocation3], 256
    $region13: #{tpu_custom_call.1} parent=1 // pred_fallthru
      _
    // Predicated region
    $region14: #{tpu_custom_call.1} parent=1 // pred_check
      _
    $region15: #{tpu_custom_call.1} parent=1 // pred_check_branch
      %38 = sbr.rel (0) target = $region17
    $region16: #{tpu_custom_call.1} parent=1 // pred_region
      %39 = dma.done [#allocation6], 256
    $region17: #{tpu_custom_call.1} parent=1 // pred_fallthru
      _
    %p40 = scmp.eq.s32.totalorder 0, 0
    // Predicated region
    $region18: #{tpu_custom_call.1} parent=1 // pred_check
      %p41 = pneg %p40
    $region19: #{tpu_custom_call.1} parent=1 // pred_check_branch
      %43 = sbr.rel (%p41) target = $region21
    $region20: #{tpu_custom_call.1} parent=1 // pred_region
      %44 = vst [vmem:[#allocation7] sm:$0xff] 0.0
    $region21: #{tpu_custom_call.1} parent=1 // pred_fallthru
      _
    %v45 = vld [vmem:[#allocation2] sm:$0xff]
    %v46 = vld [vmem:[#allocation2 + $0x8] sm:$0xff]
    %v47 = vld [vmem:[#allocation5] sm:$0xff]
    %v48 = vld [vmem:[#allocation5 + $0x8] sm:$0xff]
    %v49 = vmul.f32 %v45, %v47
    %v50 = vmul.f32 %v46, %v48
    %v51 = vsub.f32 1.0, %v49
    %v52 = vsub.f32 1.0, %v50
    %v53 = vmax.f32 %v51, 0.0
    %v54 = vmax.f32 %v52, 0.0
    %v55 = vld [vmem:[#allocation7] sm:$0xff]
    %v56 = vadd.f32 %v53, %v54
    %v57 = vadd.f32 %v55, %v56
    %58 = vst [vmem:[#allocation7] sm:$0xff] %v57
    // Predicated region
    $region22: #{tpu_custom_call.1} parent=1 // pred_check
      _
    $region23: #{tpu_custom_call.1} parent=1 // pred_check_branch
      %60 = sbr.rel (0) target = $region25
    $region24: #{tpu_custom_call.1} parent=1 // pred_region
      %s62 = ssub.s32 128, 128
      %63 = vsyncadd [#allocation4], %s62
      %s65 = sshll.u32 [#allocation7], 4
      %s66 = int_to_ptr.vmem [resolvable:$true] %s65
      %68 = dma.vmem_to_hbm [thread:$0]  %s66, 128, %s2, [#allocation4]
    $region25: #{tpu_custom_call.1} parent=1 // pred_fallthru
      _
    // Predicated region
    $region26: #{tpu_custom_call.1} parent=1 // pred_check
      _
    $region27: #{tpu_custom_call.1} parent=1 // pred_check_branch
      %70 = sbr.rel (0) target = $region29
    $region28: #{tpu_custom_call.1} parent=1 // pred_region
      %71 = dma.done [#allocation4], 128
    $region29: #{tpu_custom_call.1} parent=1 // pred_fallthru
      _
    %72 = vsyncpa [#allocation3], 1
    %73 = vsyncpa [#allocation6], 1
    %74 = vsyncpa [#allocation4], 1

</llo_original>
